<compile_context>
chip_gen: v6e
topology: v6e:2x2x1
jax: 0.10.0
libtpu: 0.0.40
codegen_flags: <defaults>
</compile_context>

<pallas_src>
import math

import jax
import jax.numpy as jnp
from jax import lax
from jax.experimental import pallas as pl
from jax.experimental.pallas import tpu as pltpu

# ---- model config (small, synthetic) ----
BATCH = 2
SEQ = 8
HIDDEN = 32
NUM_HEADS = 4
HEAD_DIM = HIDDEN // NUM_HEADS
LN_EPS = 1e-12


def smith_attention_kernel(
    x_ref,      # (1, S, H)   f32  activations for this batch element
    mask_ref,   # (1, 1, S)   f32  additive attention mask row
    wqkv_ref,   # (H, 3*H)    bf16 [Wq*scale | Wk | Wv], pre-transposed (in, out)
    bqkv_ref,   # (1, 3*H)    f32  [bq*scale | bk | bv]
    wo_ref,     # (H, H)      bf16 output.dense weight, pre-transposed (in, out)
    bo_ref,     # (1, H)      f32
    gamma_ref,  # (1, H)      f32  LayerNorm weight
    beta_ref,   # (1, H)      f32  LayerNorm bias
    out_ref,    # (1, S, H)
):
    S, H, NH, Dh = SEQ, HIDDEN, NUM_HEADS, HEAD_DIM

    x = x_ref[...][0]                              # (S, H) f32 (kept f32 for residual/LN)
    x_bf = x.astype(jnp.bfloat16)

    # ---- fused QKV projection: single MXU matmul, f32 accumulation -------------
    qkv = jnp.dot(x_bf, wqkv_ref[...],
                  preferred_element_type=jnp.float32) + bqkv_ref[...]   # (S, 3H) f32

    # Mask broadcast hoisted out of the head loop (broadcast_in_dim is not CSE'd).
    mask_bc = jnp.broadcast_to(mask_ref[...][0], (S, S))                # (S, S)

    # ---- per-head attention (static lane slices; NH=4 unrolled) ----------------
    ctx_heads = []
    for h in range(NH):
        lo = h * Dh
        q_h = qkv[:, lo:lo + Dh].astype(jnp.bfloat16)                  # (S, Dh)
        k_h = qkv[:, H + lo:H + lo + Dh].astype(jnp.bfloat16)          # (S, Dh)
        v_h = qkv[:, 2 * H + lo:2 * H + lo + Dh].astype(jnp.bfloat16)  # (S, Dh)

        # Contract over Dh without transposing K (dot_general dimension numbers).
        s_h = lax.dot_general(q_h, k_h, (((1,), (1,)), ((), ())),
                              preferred_element_type=jnp.float32)      # (S, S) f32
        s_h = s_h + mask_bc

        m_h = jnp.max(s_h, axis=-1, keepdims=True)
        e_h = jnp.exp(s_h - m_h)                                        # f32 (EUP)
        d_h = jnp.sum(e_h, axis=-1, keepdims=True)

        c_h = jnp.dot(e_h.astype(jnp.bfloat16), v_h,
                      preferred_element_type=jnp.float32)               # (S, Dh) f32
        # Normalize after P.V on the small tensor; approx reciprocal -> EUP slot.
        ctx_heads.append(c_h * pl.reciprocal(d_h, approx=True))

    # Heads concatenated along lanes in head order == torch context_layer layout.
    ctx = jnp.concatenate(ctx_heads, axis=-1)                           # (S, H) f32

    # ---- output.dense (single matmul) + residual + LayerNorm --------------------
    out = jnp.dot(ctx.astype(jnp.bfloat16), wo_ref[...],
                  preferred_element_type=jnp.float32) + bo_ref[...]     # (S, H) f32

    res = out + x
    mean = jnp.mean(res, axis=-1, keepdims=True)
    var = jnp.mean((res - mean) ** 2, axis=-1, keepdims=True)
    y = (res - mean) * lax.rsqrt(var + LN_EPS) * gamma_ref[...] + beta_ref[...]
    out_ref[...] = y[None].astype(out_ref.dtype)


def smith_attention(x, mask, params):
    """x: (B, S, H) f32, mask: (B, 1, S) additive f32."""
    wq, bq, wk, bk, wv, bv, wo, bo, gamma, beta = params
    B, S, H = x.shape
    scale = 1.0 / math.sqrt(HEAD_DIM)

    # Weight prep in the wrapper (free): PyTorch (out,in) -> (in,out), fuse Q/K/V
    # column-wise (head h occupies columns h*Dh:(h+1)*Dh inside each H-wide block),
    # fold the 1/sqrt(Dh) score scale into the Q columns, store MXU feeds as bf16.
    wqkv = jnp.concatenate([wq.T * scale, wk.T, wv.T], axis=-1).astype(jnp.bfloat16)  # (H, 3H)
    bqkv = jnp.concatenate([bq * scale, bk, bv], axis=-1)                             # (1, 3H) f32
    wo_t = wo.T.astype(jnp.bfloat16)                                                  # (H, H)

    return pl.pallas_call(
        smith_attention_kernel,
        out_shape=jax.ShapeDtypeStruct((B, S, H), x.dtype),
        grid_spec=pltpu.PrefetchScalarGridSpec(
            num_scalar_prefetch=0,
            grid=(B,),
            in_specs=[
                pl.BlockSpec((1, S, H), lambda b: (b, 0, 0)),      # x
                pl.BlockSpec((1, 1, S), lambda b: (b, 0, 0)),      # mask
                pl.BlockSpec((H, 3 * H), lambda b: (0, 0)),        # wqkv (resident)
                pl.BlockSpec((1, 3 * H), lambda b: (0, 0)),        # bqkv
                pl.BlockSpec((H, H), lambda b: (0, 0)),            # wo.T
                pl.BlockSpec((1, H), lambda b: (0, 0)),            # bo
                pl.BlockSpec((1, H), lambda b: (0, 0)),            # gamma
                pl.BlockSpec((1, H), lambda b: (0, 0)),            # beta
            ],
            out_specs=pl.BlockSpec((1, S, H), lambda b: (b, 0, 0)),
        ),
        compiler_params=pltpu.CompilerParams(
            dimension_semantics=("parallel",)),
    )(x, mask, wqkv, bqkv, wo_t, bo, gamma, beta)


def smith_attention_reference(x, mask, params):
    """Pure-JAX (f32) mirror of the PyTorch forward (eval mode) for verification."""
    wq, bq, wk, bk, wv, bv, wo, bo, gamma, beta = params
    B, S, H = x.shape

    def split_heads(t):  # (B, S, H) -> (B, nh, S, Dh)
        return jnp.transpose(t.reshape(B, S, NUM_HEADS, HEAD_DIM), (0, 2, 1, 3))

    q = split_heads(x @ wq.T + bq[0])
    k = split_heads(x @ wk.T + bk[0])
    v = split_heads(x @ wv.T + bv[0])

    scores = jnp.einsum("bhqd,bhkd->bhqk", q, k) / math.sqrt(HEAD_DIM)
    scores = scores + mask[:, None, :, :]          # (B,1,S) -> (B,1,1,S) broadcast
    probs = jax.nn.softmax(scores, axis=-1)
    ctx = jnp.einsum("bhqk,bhkd->bhqd", probs, v)
    ctx = jnp.transpose(ctx, (0, 2, 1, 3)).reshape(B, S, H)

    out = ctx @ wo.T + bo[0]
    res = out + x
    mean = jnp.mean(res, axis=-1, keepdims=True)
    var = jnp.mean((res - mean) ** 2, axis=-1, keepdims=True)
    return (res - mean) / jnp.sqrt(var + LN_EPS) * gamma[0] + beta[0]


def make_params(key):
    ks = jax.random.split(key, 8)
    s = 0.05
    wq = s * jax.random.normal(ks[0], (HIDDEN, HIDDEN), jnp.float32)
    wk = s * jax.random.normal(ks[1], (HIDDEN, HIDDEN), jnp.float32)
    wv = s * jax.random.normal(ks[2], (HIDDEN, HIDDEN), jnp.float32)
    wo = s * jax.random.normal(ks[3], (HIDDEN, HIDDEN), jnp.float32)
    bq = s * jax.random.normal(ks[4], (1, HIDDEN), jnp.float32)
    bk = s * jax.random.normal(ks[5], (1, HIDDEN), jnp.float32)
    bv = s * jax.random.normal(ks[6], (1, HIDDEN), jnp.float32)
    bo = s * jax.random.normal(ks[7], (1, HIDDEN), jnp.float32)
    gamma = jnp.ones((1, HIDDEN), jnp.float32)   # LayerNorm default init
    beta = jnp.zeros((1, HIDDEN), jnp.float32)
    return (wq, bq, wk, bk, wv, bv, wo, bo, gamma, beta)


if __name__ == "__main__":
    key = jax.random.PRNGKey(0)
    k_x, k_p = jax.random.split(key)

    x = jax.random.normal(k_x, (BATCH, SEQ, HIDDEN), jnp.float32)
    params = make_params(k_p)

    # Additive mask: mask out the last two key positions of batch element 1.
    mask = jnp.zeros((BATCH, 1, SEQ), jnp.float32)
    mask = mask.at[1, 0, SEQ - 2:].set(-1e9)

    out = jax.block_until_ready(smith_attention(x, mask, params))
    ref = smith_attention_reference(x, mask, params)

    assert out.shape == (BATCH, SEQ, HIDDEN)
    # Tolerance covers bf16 MXU operands (f32 accumulation) and the approx EUP
    # reciprocal vs. the exact-f32 reference; estimated max error ~1e-3 on O(1) outputs.
    assert jnp.allclose(out, ref, atol=2e-3, rtol=2e-3), "mismatch vs JAX reference"

    print("KERNEL_OK")
</pallas_src>

<mosaic_0001>
module attributes {stable_mosaic.version = 11 : i64} {
  func.func @smith_attention_kernel(%arg0: i32, %arg1: memref<1x8x32xf32, #tpu.memory_space<vmem>>, %arg2: memref<1x1x8xf32, #tpu.memory_space<vmem>>, %arg3: memref<32x96xbf16, #tpu.memory_space<vmem>>, %arg4: memref<1x96xf32, #tpu.memory_space<vmem>>, %arg5: memref<32x32xbf16, #tpu.memory_space<vmem>>, %arg6: memref<1x32xf32, #tpu.memory_space<vmem>>, %arg7: memref<1x32xf32, #tpu.memory_space<vmem>>, %arg8: memref<1x32xf32, #tpu.memory_space<vmem>>, %arg9: memref<1x8x32xf32, #tpu.memory_space<vmem>>) attributes {dimension_semantics = [#tpu.dimension_semantics<parallel>], iteration_bounds = array<i64: 2>, scalar_prefetch = 0 : i64, scratch_operands = 0 : i64, tpu.core_type = #tpu.core_type<tc>, window_params = [{transform_indices = @transform_0, window_bounds = array<i64: 1, 8, 32>}, {transform_indices = @transform_1, window_bounds = array<i64: 1, 1, 8>}, {pipeline_mode = #tpu.pipeline_mode<synchronous>, transform_indices = @transform_2, window_bounds = array<i64: 32, 96>}, {pipeline_mode = #tpu.pipeline_mode<synchronous>, transform_indices = @transform_3, window_bounds = array<i64: 1, 96>}, {pipeline_mode = #tpu.pipeline_mode<synchronous>, transform_indices = @transform_4, window_bounds = array<i64: 32, 32>}, {pipeline_mode = #tpu.pipeline_mode<synchronous>, transform_indices = @transform_5, window_bounds = array<i64: 1, 32>}, {pipeline_mode = #tpu.pipeline_mode<synchronous>, transform_indices = @transform_6, window_bounds = array<i64: 1, 32>}, {pipeline_mode = #tpu.pipeline_mode<synchronous>, transform_indices = @transform_7, window_bounds = array<i64: 1, 32>}, {transform_indices = @transform_8, window_bounds = array<i64: 1, 8, 32>}]} {
    %c0 = arith.constant 0 : index
    %c0_0 = arith.constant 0 : index
    %c0_1 = arith.constant 0 : index
    %0 = vector.load %arg1[%c0, %c0_0, %c0_1] : memref<1x8x32xf32, #tpu.memory_space<vmem>>, vector<1x8x32xf32>
    %1 = vector.shape_cast %0 : vector<1x8x32xf32> to vector<8x32xf32>
    %2 = arith.truncf %1 : vector<8x32xf32> to vector<8x32xbf16>
    %c0_2 = arith.constant 0 : index
    %c0_3 = arith.constant 0 : index
    %3 = vector.load %arg3[%c0_2, %c0_3] : memref<32x96xbf16, #tpu.memory_space<vmem>>, vector<32x96xbf16>
    %cst = arith.constant dense<0.000000e+00> : vector<8x96xf32>
    %4 = tpu.matmul %2, %3, %cst {dimension_numbers = #tpu.dot_dimension_numbers<[1], [0], [0], [1], [0, 0, 1, 1], [], []>} : vector<8x32xbf16>, vector<32x96xbf16>, vector<8x96xf32> -> vector<8x96xf32>
    %c0_4 = arith.constant 0 : index
    %c0_5 = arith.constant 0 : index
    %5 = vector.load %arg4[%c0_4, %c0_5] : memref<1x96xf32, #tpu.memory_space<vmem>>, vector<1x96xf32>
    %6 = vector.broadcast %5 : vector<1x96xf32> to vector<8x96xf32>
    %7 = arith.addf %4, %6 : vector<8x96xf32>
    %c0_6 = arith.constant 0 : index
    %c0_7 = arith.constant 0 : index
    %c0_8 = arith.constant 0 : index
    %8 = vector.load %arg2[%c0_6, %c0_7, %c0_8] : memref<1x1x8xf32, #tpu.memory_space<vmem>>, vector<1x1x8xf32>
    %9 = vector.shape_cast %8 : vector<1x1x8xf32> to vector<1x8xf32>
    %10 = vector.shape_cast %9 : vector<1x8xf32> to vector<1x8xf32>
    %11 = vector.broadcast %10 : vector<1x8xf32> to vector<8x8xf32>
    %12 = vector.extract_strided_slice %7 {offsets = [0, 0], sizes = [8, 8], strides = [1, 1]} : vector<8x96xf32> to vector<8x8xf32>
    %13 = arith.truncf %12 : vector<8x8xf32> to vector<8x8xbf16>
    %14 = vector.extract_strided_slice %7 {offsets = [0, 32], sizes = [8, 8], strides = [1, 1]} : vector<8x96xf32> to vector<8x8xf32>
    %15 = arith.truncf %14 : vector<8x8xf32> to vector<8x8xbf16>
    %16 = vector.extract_strided_slice %7 {offsets = [0, 64], sizes = [8, 8], strides = [1, 1]} : vector<8x96xf32> to vector<8x8xf32>
    %17 = arith.truncf %16 : vector<8x8xf32> to vector<8x8xbf16>
    %cst_9 = arith.constant dense<0.000000e+00> : vector<8x8xf32>
    %18 = tpu.matmul %13, %15, %cst_9 {dimension_numbers = #tpu.dot_dimension_numbers<[1], [1], [0], [0], [0, 0, 1, 0], [], []>} : vector<8x8xbf16>, vector<8x8xbf16>, vector<8x8xf32> -> vector<8x8xf32>
    %19 = arith.addf %18, %11 : vector<8x8xf32>
    %cst_10 = arith.constant dense<0xFF800000> : vector<8xf32>
    %20 = vector.multi_reduction <maximumf>, %19, %cst_10 [1] : vector<8x8xf32> to vector<8xf32>
    %21 = vector.shape_cast %20 : vector<8xf32> to vector<8x1xf32>
    %22 = vector.broadcast %21 : vector<8x1xf32> to vector<8x8xf32>
    %23 = arith.subf %19, %22 : vector<8x8xf32>
    %24 = math.exp %23 : vector<8x8xf32>
    %cst_11 = arith.constant dense<0.000000e+00> : vector<8xf32>
    %25 = vector.multi_reduction <add>, %24, %cst_11 [1] : vector<8x8xf32> to vector<8xf32>
    %26 = vector.shape_cast %25 : vector<8xf32> to vector<8x1xf32>
    %27 = arith.truncf %24 : vector<8x8xf32> to vector<8x8xbf16>
    %cst_12 = arith.constant dense<0.000000e+00> : vector<8x8xf32>
    %28 = tpu.matmul %27, %17, %cst_12 {dimension_numbers = #tpu.dot_dimension_numbers<[1], [0], [0], [1], [0, 0, 1, 1], [], []>} : vector<8x8xbf16>, vector<8x8xbf16>, vector<8x8xf32> -> vector<8x8xf32>
    %29 = tpu.reciprocal %26 {approx = true} : vector<8x1xf32> -> vector<8x1xf32>
    %30 = vector.broadcast %29 : vector<8x1xf32> to vector<8x8xf32>
    %31 = arith.mulf %28, %30 : vector<8x8xf32>
    %32 = vector.extract_strided_slice %7 {offsets = [0, 8], sizes = [8, 8], strides = [1, 1]} : vector<8x96xf32> to vector<8x8xf32>
    %33 = arith.truncf %32 : vector<8x8xf32> to vector<8x8xbf16>
    %34 = vector.extract_strided_slice %7 {offsets = [0, 40], sizes = [8, 8], strides = [1, 1]} : vector<8x96xf32> to vector<8x8xf32>
    %35 = arith.truncf %34 : vector<8x8xf32> to vector<8x8xbf16>
    %36 = vector.extract_strided_slice %7 {offsets = [0, 72], sizes = [8, 8], strides = [1, 1]} : vector<8x96xf32> to vector<8x8xf32>
    %37 = arith.truncf %36 : vector<8x8xf32> to vector<8x8xbf16>
    %cst_13 = arith.constant dense<0.000000e+00> : vector<8x8xf32>
    %38 = tpu.matmul %33, %35, %cst_13 {dimension_numbers = #tpu.dot_dimension_numbers<[1], [1], [0], [0], [0, 0, 1, 0], [], []>} : vector<8x8xbf16>, vector<8x8xbf16>, vector<8x8xf32> -> vector<8x8xf32>
    %39 = arith.addf %38, %11 : vector<8x8xf32>
    %cst_14 = arith.constant dense<0xFF800000> : vector<8xf32>
    %40 = vector.multi_reduction <maximumf>, %39, %cst_14 [1] : vector<8x8xf32> to vector<8xf32>
    %41 = vector.shape_cast %40 : vector<8xf32> to vector<8x1xf32>
    %42 = vector.broadcast %41 : vector<8x1xf32> to vector<8x8xf32>
    %43 = arith.subf %39, %42 : vector<8x8xf32>
    %44 = math.exp %43 : vector<8x8xf32>
    %cst_15 = arith.constant dense<0.000000e+00> : vector<8xf32>
    %45 = vector.multi_reduction <add>, %44, %cst_15 [1] : vector<8x8xf32> to vector<8xf32>
    %46 = vector.shape_cast %45 : vector<8xf32> to vector<8x1xf32>
    %47 = arith.truncf %44 : vector<8x8xf32> to vector<8x8xbf16>
    %cst_16 = arith.constant dense<0.000000e+00> : vector<8x8xf32>
    %48 = tpu.matmul %47, %37, %cst_16 {dimension_numbers = #tpu.dot_dimension_numbers<[1], [0], [0], [1], [0, 0, 1, 1], [], []>} : vector<8x8xbf16>, vector<8x8xbf16>, vector<8x8xf32> -> vector<8x8xf32>
    %49 = tpu.reciprocal %46 {approx = true} : vector<8x1xf32> -> vector<8x1xf32>
    %50 = vector.broadcast %49 : vector<8x1xf32> to vector<8x8xf32>
    %51 = arith.mulf %48, %50 : vector<8x8xf32>
    %52 = vector.extract_strided_slice %7 {offsets = [0, 16], sizes = [8, 8], strides = [1, 1]} : vector<8x96xf32> to vector<8x8xf32>
    %53 = arith.truncf %52 : vector<8x8xf32> to vector<8x8xbf16>
    %54 = vector.extract_strided_slice %7 {offsets = [0, 48], sizes = [8, 8], strides = [1, 1]} : vector<8x96xf32> to vector<8x8xf32>
    %55 = arith.truncf %54 : vector<8x8xf32> to vector<8x8xbf16>
    %56 = vector.extract_strided_slice %7 {offsets = [0, 80], sizes = [8, 8], strides = [1, 1]} : vector<8x96xf32> to vector<8x8xf32>
    %57 = arith.truncf %56 : vector<8x8xf32> to vector<8x8xbf16>
    %cst_17 = arith.constant dense<0.000000e+00> : vector<8x8xf32>
    %58 = tpu.matmul %53, %55, %cst_17 {dimension_numbers = #tpu.dot_dimension_numbers<[1], [1], [0], [0], [0, 0, 1, 0], [], []>} : vector<8x8xbf16>, vector<8x8xbf16>, vector<8x8xf32> -> vector<8x8xf32>
    %59 = arith.addf %58, %11 : vector<8x8xf32>
    %cst_18 = arith.constant dense<0xFF800000> : vector<8xf32>
    %60 = vector.multi_reduction <maximumf>, %59, %cst_18 [1] : vector<8x8xf32> to vector<8xf32>
    %61 = vector.shape_cast %60 : vector<8xf32> to vector<8x1xf32>
    %62 = vector.broadcast %61 : vector<8x1xf32> to vector<8x8xf32>
    %63 = arith.subf %59, %62 : vector<8x8xf32>
    %64 = math.exp %63 : vector<8x8xf32>
    %cst_19 = arith.constant dense<0.000000e+00> : vector<8xf32>
    %65 = vector.multi_reduction <add>, %64, %cst_19 [1] : vector<8x8xf32> to vector<8xf32>
    %66 = vector.shape_cast %65 : vector<8xf32> to vector<8x1xf32>
    %67 = arith.truncf %64 : vector<8x8xf32> to vector<8x8xbf16>
    %cst_20 = arith.constant dense<0.000000e+00> : vector<8x8xf32>
    %68 = tpu.matmul %67, %57, %cst_20 {dimension_numbers = #tpu.dot_dimension_numbers<[1], [0], [0], [1], [0, 0, 1, 1], [], []>} : vector<8x8xbf16>, vector<8x8xbf16>, vector<8x8xf32> -> vector<8x8xf32>
    %69 = tpu.reciprocal %66 {approx = true} : vector<8x1xf32> -> vector<8x1xf32>
    %70 = vector.broadcast %69 : vector<8x1xf32> to vector<8x8xf32>
    %71 = arith.mulf %68, %70 : vector<8x8xf32>
    %72 = vector.extract_strided_slice %7 {offsets = [0, 24], sizes = [8, 8], strides = [1, 1]} : vector<8x96xf32> to vector<8x8xf32>
    %73 = arith.truncf %72 : vector<8x8xf32> to vector<8x8xbf16>
    %74 = vector.extract_strided_slice %7 {offsets = [0, 56], sizes = [8, 8], strides = [1, 1]} : vector<8x96xf32> to vector<8x8xf32>
    %75 = arith.truncf %74 : vector<8x8xf32> to vector<8x8xbf16>
    %76 = vector.extract_strided_slice %7 {offsets = [0, 88], sizes = [8, 8], strides = [1, 1]} : vector<8x96xf32> to vector<8x8xf32>
    %77 = arith.truncf %76 : vector<8x8xf32> to vector<8x8xbf16>
    %cst_21 = arith.constant dense<0.000000e+00> : vector<8x8xf32>
    %78 = tpu.matmul %73, %75, %cst_21 {dimension_numbers = #tpu.dot_dimension_numbers<[1], [1], [0], [0], [0, 0, 1, 0], [], []>} : vector<8x8xbf16>, vector<8x8xbf16>, vector<8x8xf32> -> vector<8x8xf32>
    %79 = arith.addf %78, %11 : vector<8x8xf32>
    %cst_22 = arith.constant dense<0xFF800000> : vector<8xf32>
    %80 = vector.multi_reduction <maximumf>, %79, %cst_22 [1] : vector<8x8xf32> to vector<8xf32>
    %81 = vector.shape_cast %80 : vector<8xf32> to vector<8x1xf32>
    %82 = vector.broadcast %81 : vector<8x1xf32> to vector<8x8xf32>
    %83 = arith.subf %79, %82 : vector<8x8xf32>
    %84 = math.exp %83 : vector<8x8xf32>
    %cst_23 = arith.constant dense<0.000000e+00> : vector<8xf32>
    %85 = vector.multi_reduction <add>, %84, %cst_23 [1] : vector<8x8xf32> to vector<8xf32>
    %86 = vector.shape_cast %85 : vector<8xf32> to vector<8x1xf32>
    %87 = arith.truncf %84 : vector<8x8xf32> to vector<8x8xbf16>
    %cst_24 = arith.constant dense<0.000000e+00> : vector<8x8xf32>
    %88 = tpu.matmul %87, %77, %cst_24 {dimension_numbers = #tpu.dot_dimension_numbers<[1], [0], [0], [1], [0, 0, 1, 1], [], []>} : vector<8x8xbf16>, vector<8x8xbf16>, vector<8x8xf32> -> vector<8x8xf32>
    %89 = tpu.reciprocal %86 {approx = true} : vector<8x1xf32> -> vector<8x1xf32>
    %90 = vector.broadcast %89 : vector<8x1xf32> to vector<8x8xf32>
    %91 = arith.mulf %88, %90 : vector<8x8xf32>
    %92 = tpu.concatenate %31, %51, %71, %91 in 1 : vector<8x8xf32>, vector<8x8xf32>, vector<8x8xf32>, vector<8x8xf32> -> vector<8x32xf32>
    %93 = arith.truncf %92 : vector<8x32xf32> to vector<8x32xbf16>
    %c0_25 = arith.constant 0 : index
    %c0_26 = arith.constant 0 : index
    %94 = vector.load %arg5[%c0_25, %c0_26] : memref<32x32xbf16, #tpu.memory_space<vmem>>, vector<32x32xbf16>
    %cst_27 = arith.constant dense<0.000000e+00> : vector<8x32xf32>
    %95 = tpu.matmul %93, %94, %cst_27 {dimension_numbers = #tpu.dot_dimension_numbers<[1], [0], [0], [1], [0, 0, 1, 1], [], []>} : vector<8x32xbf16>, vector<32x32xbf16>, vector<8x32xf32> -> vector<8x32xf32>
    %c0_28 = arith.constant 0 : index
    %c0_29 = arith.constant 0 : index
    %96 = vector.load %arg6[%c0_28, %c0_29] : memref<1x32xf32, #tpu.memory_space<vmem>>, vector<1x32xf32>
    %97 = vector.broadcast %96 : vector<1x32xf32> to vector<8x32xf32>
    %98 = arith.addf %95, %97 : vector<8x32xf32>
    %99 = arith.addf %98, %1 : vector<8x32xf32>
    %cst_30 = arith.constant dense<0.000000e+00> : vector<8xf32>
    %100 = vector.multi_reduction <add>, %99, %cst_30 [1] : vector<8x32xf32> to vector<8xf32>
    %101 = vector.shape_cast %100 : vector<8xf32> to vector<8x1xf32>
    %cst_31 = arith.constant 3.200000e+01 : f32
    %102 = vector.broadcast %cst_31 : f32 to vector<8x1xf32>
    %103 = arith.divf %101, %102 : vector<8x1xf32>
    %104 = vector.broadcast %103 : vector<8x1xf32> to vector<8x32xf32>
    %105 = arith.subf %99, %104 : vector<8x32xf32>
    %106 = arith.mulf %105, %105 : vector<8x32xf32>
    %cst_32 = arith.constant dense<0.000000e+00> : vector<8xf32>
    %107 = vector.multi_reduction <add>, %106, %cst_32 [1] : vector<8x32xf32> to vector<8xf32>
    %108 = vector.shape_cast %107 : vector<8xf32> to vector<8x1xf32>
    %cst_33 = arith.constant 3.200000e+01 : f32
    %109 = vector.broadcast %cst_33 : f32 to vector<8x1xf32>
    %110 = arith.divf %108, %109 : vector<8x1xf32>
    %111 = vector.broadcast %103 : vector<8x1xf32> to vector<8x32xf32>
    %112 = arith.subf %99, %111 : vector<8x32xf32>
    %cst_34 = arith.constant 9.99999996E-13 : f32
    %113 = vector.broadcast %cst_34 : f32 to vector<8x1xf32>
    %114 = arith.addf %110, %113 : vector<8x1xf32>
    %115 = math.rsqrt %114 : vector<8x1xf32>
    %116 = vector.broadcast %115 : vector<8x1xf32> to vector<8x32xf32>
    %117 = arith.mulf %112, %116 : vector<8x32xf32>
    %c0_35 = arith.constant 0 : index
    %c0_36 = arith.constant 0 : index
    %118 = vector.load %arg7[%c0_35, %c0_36] : memref<1x32xf32, #tpu.memory_space<vmem>>, vector<1x32xf32>
    %119 = vector.broadcast %118 : vector<1x32xf32> to vector<8x32xf32>
    %120 = arith.mulf %117, %119 : vector<8x32xf32>
    %c0_37 = arith.constant 0 : index
    %c0_38 = arith.constant 0 : index
    %121 = vector.load %arg8[%c0_37, %c0_38] : memref<1x32xf32, #tpu.memory_space<vmem>>, vector<1x32xf32>
    %122 = vector.broadcast %121 : vector<1x32xf32> to vector<8x32xf32>
    %123 = arith.addf %120, %122 : vector<8x32xf32>
    %124 = vector.shape_cast %123 : vector<8x32xf32> to vector<1x8x32xf32>
    %c0_39 = arith.constant 0 : index
    %c0_40 = arith.constant 0 : index
    %c0_41 = arith.constant 0 : index
    %125 = vector.load %arg9[%c0_39, %c0_40, %c0_41] : memref<1x8x32xf32, #tpu.memory_space<vmem>>, vector<1x8x32xf32>
    tpu.vector_store %arg9[%c0_39, %c0_40, %c0_41], %124 {strides = array<i32>} : memref<1x8x32xf32, #tpu.memory_space<vmem>>, vector<1x8x32xf32>,
    return
  }
  func.func @transform_0(%arg0: i32) -> (i32, i32, i32) {
    %c0_i32 = arith.constant 0 : i32
    %c0_i32_0 = arith.constant 0 : i32
    %c0_i32_1 = arith.constant 0 : i32
    return %arg0, %c0_i32, %c0_i32_0 : i32, i32, i32
  }
  func.func @transform_1(%arg0: i32) -> (i32, i32, i32) {
    %c0_i32 = arith.constant 0 : i32
    %c0_i32_0 = arith.constant 0 : i32
    %c0_i32_1 = arith.constant 0 : i32
    return %arg0, %c0_i32, %c0_i32_0 : i32, i32, i32
  }
  func.func @transform_2(%arg0: i32) -> (i32, i32) {
    %c0_i32 = arith.constant 0 : i32
    %c0_i32_0 = arith.constant 0 : i32
    %c0_i32_1 = arith.constant 0 : i32
    return %c0_i32, %c0_i32_0 : i32, i32
  }
  func.func @transform_3(%arg0: i32) -> (i32, i32) {
    %c0_i32 = arith.constant 0 : i32
    %c0_i32_0 = arith.constant 0 : i32
    %c0_i32_1 = arith.constant 0 : i32
    return %c0_i32, %c0_i32_0 : i32, i32
  }
  func.func @transform_4(%arg0: i32) -> (i32, i32) {
    %c0_i32 = arith.constant 0 : i32
    %c0_i32_0 = arith.constant 0 : i32
    %c0_i32_1 = arith.constant 0 : i32
    return %c0_i32, %c0_i32_0 : i32, i32
  }
  func.func @transform_5(%arg0: i32) -> (i32, i32) {
    %c0_i32 = arith.constant 0 : i32
    %c0_i32_0 = arith.constant 0 : i32
    %c0_i32_1 = arith.constant 0 : i32
    return %c0_i32, %c0_i32_0 : i32, i32
  }
  func.func @transform_6(%arg0: i32) -> (i32, i32) {
    %c0_i32 = arith.constant 0 : i32
    %c0_i32_0 = arith.constant 0 : i32
    %c0_i32_1 = arith.constant 0 : i32
    return %c0_i32, %c0_i32_0 : i32, i32
  }
  func.func @transform_7(%arg0: i32) -> (i32, i32) {
    %c0_i32 = arith.constant 0 : i32
    %c0_i32_0 = arith.constant 0 : i32
    %c0_i32_1 = arith.constant 0 : i32
    return %c0_i32, %c0_i32_0 : i32, i32
  }
  func.func @transform_8(%arg0: i32) -> (i32, i32, i32) {
    %c0_i32 = arith.constant 0 : i32
    %c0_i32_0 = arith.constant 0 : i32
    %c0_i32_1 = arith.constant 0 : i32
    return %arg0, %c0_i32, %c0_i32_0 : i32, i32, i32
  }
}

</mosaic_0001>

<llo_original>
// kernel: tpu_custom_call.1
$region0: #{tpu_custom_call.1}
  #allocation0 [shape = 'u32[]', space=smem, size = 0x4, offset = 0x4, fixed_abs, tag = 'smem constant byte address 0x4 - core index']
  #allocation1 [shape = 'u32[144,128]{1,0:T(1,128)}', space=vmem, size = 0x12000, scoped, tag = 'internal scratch']
  %s0 = inlined_call_operand.hbm [shape: f32[2,8,32], index: 0, kind: input, shape index: {}]
  %s1 = inlined_call_operand.hbm [shape: f32[2,1,8], index: 1, kind: input, shape index: {}]
  %s2 = inlined_call_operand.hbm [shape: bf16[32,96], index: 2, kind: input, shape index: {}]
  %s3 = inlined_call_operand.vmem [shape: f32[1,96], index: 3, kind: input, shape index: {}]
  %s4 = inlined_call_operand.hbm [shape: bf16[32,32], index: 4, kind: input, shape index: {}]
  %s5 = inlined_call_operand.vmem [shape: f32[1,32], index: 5, kind: input, shape index: {}]
  %s6 = inlined_call_operand.vmem [shape: f32[1,32], index: 6, kind: input, shape index: {}]
  %s7 = inlined_call_operand.vmem [shape: f32[1,32], index: 7, kind: input, shape index: {}]
  %s8 = inlined_call_operand.hbm [shape: f32[2,8,32], index: 8, kind: output, shape index: {}]
  %s9 = sld [smem:[#allocation0]]
  $region81: #{tpu_custom_call.1} parent=0
    _
  %s11 = ssub.s32 1, %s9
  %s12 = scalar_select 0, %s11, %s9
  $region1: #{tpu_custom_call.1} parent=0
    #allocation2 [shape = 'u8[8192]{0}', space=vmem, size = 0x2000, scoped, tag = 'input window, operand 0']
    #allocation3 [shape = 's32[2]{0}', space=sflag, size = 0x8, scoped, tag = 'scoped memory for tpu_custom_call.1']
    #allocation4 [shape = 's32[2]{0}', space=sflag, size = 0x8, scoped, tag = 'scoped memory for tpu_custom_call.1']
    #allocation5 [shape = 'u8[1024]{0}', space=vmem, size = 0x400, scoped, tag = 'input window, operand 1']
    #allocation6 [shape = 's32[2]{0}', space=sflag, size = 0x8, scoped, tag = 'scoped memory for tpu_custom_call.1']
    #allocation7 [shape = 'u8[8192]{0}', space=vmem, size = 0x2000, scoped, tag = 'input window, operand 2, single buffered']
    #allocation8 [shape = 'u8[8192]{0}', space=vmem, size = 0x2000, scoped, tag = 'input window, operand 4, single buffered']
    #allocation9 [shape = 's32[1]{0}', space=sflag, size = 0x4, scoped, tag = 'scoped memory for tpu_custom_call.1']
    #allocation10 [shape = 'u8[8192]{0}', space=vmem, size = 0x2000, scoped, tag = 'output window, operand 0']
    %13 = vsyncpa [#allocation3], 0
    %s14 = scalar_lea.sflag [#allocation3], 1
    %15 = vsyncpa %s14, 0
    %16 = vsyncpa [#allocation6], 0
    %s17 = scalar_lea.sflag [#allocation6], 1
    %18 = vsyncpa %s17, 0
    %19 = vsyncpa [#allocation9], 0
    %20 = vsyncpa [#allocation4], 0
    %s21 = scalar_lea.sflag [#allocation4], 1
    %22 = vsyncpa %s21, 0
    loop: start=0, step=1, limit=4
    $region2: #{tpu_custom_call.1} parent=1 // loop_pre_header
      _
    $region3: #{tpu_custom_call.1} parent=1 // loop_header
      %s24 = sphi 0, %s28
      %p25 = scmp.ge.s32.totalorder %s24, 4
      %s34 = sphi 0, %s36
      %s37 = sphi 0, %s34
      %s38 = sphi 0, %s37
      %s54 = sphi 0, %s38
      %s60 = sphi 0, %s62
      %s63 = sphi 0, %s60
      %s64 = sphi 0, %s63
      %s80 = sphi 0, %s64
      %s84 = sphi 0, %s84
      %s86 = sphi 0, %s84
      %s87 = sphi 0, %s86
      %s101 = sphi 0, %s87
      %s105 = sphi 0, %s105
      %s107 = sphi 0, %s105
      %s108 = sphi 0, %s107
      %s122 = sphi 0, %s108
      %s126 = sphi 0, %s126
      %s128 = sphi 0, %s126
      %s129 = sphi 0, %s128
      %s143 = sphi 0, %s129
      %s147 = sphi 0, %s147
      %s149 = sphi 0, %s147
      %s150 = sphi 0, %s149
      %s164 = sphi 0, %s150
      %s168 = sphi 0, %s168
      %s170 = sphi 0, %s168
      %s171 = sphi 0, %s170
      %s185 = sphi 0, %s171
      %s189 = sphi 0, %s189
      %s191 = sphi 0, %s189
      %s192 = sphi 0, %s191
      %s206 = sphi 0, %s192
      %s212 = sphi 0, %s214
      %s215 = sphi 0, %s212
      %s216 = sphi 0, %s215
      %s232 = sphi 0, %s216
    $region4: #{tpu_custom_call.1} parent=1 // loop_header_branch
      %27 = sbr.rel (%p25) target = $region8
    $region5: #{tpu_custom_call.1} parent=1 // loop_body
      %s29 = ssub.s32 %s24, 1
      %s30 = ssub.s32 %s24, 2
      %s31 = sadd.s32 %s24, 1
      %s32 = ssub.s32 %s24, %s31
      %p33 = scmp.eq.s32.totalorder %s32, 0
      %s35 = sadd.s32 %s34, 1
      %s36 = scalar_select %p33, %s34, %s35
      %p39 = pneg %p33
      %p40 = scmp.eq.s32.totalorder %s24, 1
      %p41 = por %p39, %p40
      %p42 = scmp.ne.s32.totalorder %s34, %s37
      %p43 = scmp.eq.s32.totalorder %s24, 0
      %p44 = por %p42, %p43
      %p45 = scmp.ne.s32.totalorder %s34, %s37
      %p46 = scmp.eq.s32.totalorder %s29, 1
      %p47 = por %p45, %p46
      %p48 = scmp.ne.s32.totalorder %s37, %s38
      %p49 = scmp.eq.s32.totalorder %s29, 0
      %p50 = por %p48, %p49
      %p51 = scmp.ne.s32.totalorder %s37, %s38
      %p52 = scmp.eq.s32.totalorder %s30, 1
      %p53 = por %p51, %p52
      %p55 = scmp.ne.s32.totalorder %s38, %s54
      %p56 = scmp.eq.s32.totalorder %s30, 0
      %p57 = por %p55, %p56
      %s58 = ssub.s32 %s24, %s31
      %p59 = scmp.eq.s32.totalorder %s58, 0
      %s61 = sadd.s32 %s60, 1
      %s62 = scalar_select %p59, %s60, %s61
      %p65 = pneg %p59
      %p66 = scmp.eq.s32.totalorder %s24, 1
      %p67 = por %p65, %p66
      %p68 = scmp.ne.s32.totalorder %s60, %s63
      %p69 = scmp.eq.s32.totalorder %s24, 0
      %p70 = por %p68, %p69
      %p71 = scmp.ne.s32.totalorder %s60, %s63
      %p72 = scmp.eq.s32.totalorder %s29, 1
      %p73 = por %p71, %p72
      %p74 = scmp.ne.s32.totalorder %s63, %s64
      %p75 = scmp.eq.s32.totalorder %s29, 0
      %p76 = por %p74, %p75
      %p77 = scmp.ne.s32.totalorder %s63, %s64
      %p78 = scmp.eq.s32.totalorder %s30, 1
      %p79 = por %p77, %p78
      %p81 = scmp.ne.s32.totalorder %s64, %s80
      %p82 = scmp.eq.s32.totalorder %s30, 0
      %p83 = por %p81, %p82
      %s85 = sadd.s32 %s84, 1
      %p88 = scmp.eq.s32.totalorder %s24, 1
      %p89 = scmp.ne.s32.totalorder %s84, %s86
      %p90 = scmp.eq.s32.totalorder %s24, 0
      %p91 = por %p89, %p90
      %p92 = scmp.ne.s32.totalorder %s84, %s86
      %p93 = scmp.eq.s32.totalorder %s29, 1
      %p94 = por %p92, %p93
      %p95 = scmp.ne.s32.totalorder %s86, %s87
      %p96 = scmp.eq.s32.totalorder %s29, 0
      %p97 = por %p95, %p96
      %p98 = scmp.ne.s32.totalorder %s86, %s87
      %p99 = scmp.eq.s32.totalorder %s30, 1
      %p100 = por %p98, %p99
      %p102 = scmp.ne.s32.totalorder %s87, %s101
      %p103 = scmp.eq.s32.totalorder %s30, 0
      %p104 = por %p102, %p103
      %s106 = sadd.s32 %s105, 1
      %p109 = scmp.eq.s32.totalorder %s24, 1
      %p110 = scmp.ne.s32.totalorder %s105, %s107
      %p111 = scmp.eq.s32.totalorder %s24, 0
      %p112 = por %p110, %p111
      %p113 = scmp.ne.s32.totalorder %s105, %s107
      %p114 = scmp.eq.s32.totalorder %s29, 1
      %p115 = por %p113, %p114
      %p116 = scmp.ne.s32.totalorder %s107, %s108
      %p117 = scmp.eq.s32.totalorder %s29, 0
      %p118 = por %p116, %p117
      %p119 = scmp.ne.s32.totalorder %s107, %s108
      %p120 = scmp.eq.s32.totalorder %s30, 1
      %p121 = por %p119, %p120
      %p123 = scmp.ne.s32.totalorder %s108, %s122
      %p124 = scmp.eq.s32.totalorder %s30, 0
      %p125 = por %p123, %p124
      %s127 = sadd.s32 %s126, 1
      %p130 = scmp.eq.s32.totalorder %s24, 1
      %p131 = scmp.ne.s32.totalorder %s126, %s128
      %p132 = scmp.eq.s32.totalorder %s24, 0
      %p133 = por %p131, %p132
      %p134 = scmp.ne.s32.totalorder %s126, %s128
      %p135 = scmp.eq.s32.totalorder %s29, 1
      %p136 = por %p134, %p135
      %p137 = scmp.ne.s32.totalorder %s128, %s129
      %p138 = scmp.eq.s32.totalorder %s29, 0
      %p139 = por %p137, %p138
      %p140 = scmp.ne.s32.totalorder %s128, %s129
      %p141 = scmp.eq.s32.totalorder %s30, 1
      %p142 = por %p140, %p141
      %p144 = scmp.ne.s32.totalorder %s129, %s143
      %p145 = scmp.eq.s32.totalorder %s30, 0
      %p146 = por %p144, %p145
      %s148 = sadd.s32 %s147, 1
      %p151 = scmp.eq.s32.totalorder %s24, 1
      %p152 = scmp.ne.s32.totalorder %s147, %s149
      %p153 = scmp.eq.s32.totalorder %s24, 0
      %p154 = por %p152, %p153
      %p155 = scmp.ne.s32.totalorder %s147, %s149
      %p156 = scmp.eq.s32.totalorder %s29, 1
      %p157 = por %p155, %p156
      %p158 = scmp.ne.s32.totalorder %s149, %s150
      %p159 = scmp.eq.s32.totalorder %s29, 0
      %p160 = por %p158, %p159
      %p161 = scmp.ne.s32.totalorder %s149, %s150
      %p162 = scmp.eq.s32.totalorder %s30, 1
      %p163 = por %p161, %p162
      %p165 = scmp.ne.s32.totalorder %s150, %s164
      %p166 = scmp.eq.s32.totalorder %s30, 0
      %p167 = por %p165, %p166
      %s169 = sadd.s32 %s168, 1
      %p172 = scmp.eq.s32.totalorder %s24, 1
      %p173 = scmp.ne.s32.totalorder %s168, %s170
      %p174 = scmp.eq.s32.totalorder %s24, 0
      %p175 = por %p173, %p174
      %p176 = scmp.ne.s32.totalorder %s168, %s170
      %p177 = scmp.eq.s32.totalorder %s29, 1
      %p178 = por %p176, %p177
      %p179 = scmp.ne.s32.totalorder %s170, %s171
      %p180 = scmp.eq.s32.totalorder %s29, 0
      %p181 = por %p179, %p180
      %p182 = scmp.ne.s32.totalorder %s170, %s171
      %p183 = scmp.eq.s32.totalorder %s30, 1
      %p184 = por %p182, %p183
      %p186 = scmp.ne.s32.totalorder %s171, %s185
      %p187 = scmp.eq.s32.totalorder %s30, 0
      %p188 = por %p186, %p187
      %s190 = sadd.s32 %s189, 1
      %p193 = scmp.eq.s32.totalorder %s24, 1
      %p194 = scmp.ne.s32.totalorder %s189, %s191
      %p195 = scmp.eq.s32.totalorder %s24, 0
      %p196 = por %p194, %p195
      %p197 = scmp.ne.s32.totalorder %s189, %s191
      %p198 = scmp.eq.s32.totalorder %s29, 1
      %p199 = por %p197, %p198
      %p200 = scmp.ne.s32.totalorder %s191, %s192
      %p201 = scmp.eq.s32.totalorder %s29, 0
      %p202 = por %p200, %p201
      %p203 = scmp.ne.s32.totalorder %s191, %s192
      %p204 = scmp.eq.s32.totalorder %s30, 1
      %p205 = por %p203, %p204
      %p207 = scmp.ne.s32.totalorder %s192, %s206
      %p208 = scmp.eq.s32.totalorder %s30, 0
      %p209 = por %p207, %p208
      %s210 = ssub.s32 %s24, %s31
      %p211 = scmp.eq.s32.totalorder %s210, 0
      %s213 = sadd.s32 %s212, 1
      %s214 = scalar_select %p211, %s212, %s213
      %p217 = pneg %p211
      %p218 = scmp.eq.s32.totalorder %s24, 1
      %p219 = por %p217, %p218
      %p220 = scmp.ne.s32.totalorder %s212, %s215
      %p221 = scmp.eq.s32.totalorder %s24, 0
      %p222 = por %p220, %p221
      %p223 = scmp.ne.s32.totalorder %s212, %s215
      %p224 = scmp.eq.s32.totalorder %s29, 1
      %p225 = por %p223, %p224
      %p226 = scmp.ne.s32.totalorder %s215, %s216
      %p227 = scmp.eq.s32.totalorder %s29, 0
      %p228 = por %p226, %p227
      %p229 = scmp.ne.s32.totalorder %s215, %s216
      %p230 = scmp.eq.s32.totalorder %s30, 1
      %p231 = por %p229, %p230
      %p233 = scmp.ne.s32.totalorder %s216, %s232
      %p234 = scmp.eq.s32.totalorder %s30, 0
      %p235 = por %p233, %p234
      %p236 = scmp.le.s32.totalorder 1, %s24
      %p237 = scmp.lt.s32.totalorder %s24, 3
      %p238 = pnand %p236, %p237
      %p239 = pneg %p238
      // Predicated region
      $region9: #{tpu_custom_call.1} parent=5 // pred_check
        _
      $region10: #{tpu_custom_call.1} parent=5 // pred_check_branch
        %241 = sbr.rel (%p238) target = $region12
      $region11: #{tpu_custom_call.1} parent=5 // pred_region
        %s242 = ssub.s32 %s24, 1
        // Predicated region
        $region13: #{tpu_custom_call.1} parent=11 // pred_check
          %p243 = pneg %p97
        $region14: #{tpu_custom_call.1} parent=11 // pred_check_branch
          %245 = sbr.rel (%p243) target = $region16
        $region15: #{tpu_custom_call.1} parent=11 // pred_region
          %s247 = ssub.s32 256, 256
          %248 = vsyncadd [#allocation6], %s247
          %s249 = sshll.u32 [#allocation7], 4
          %s250 = int_to_ptr.vmem [resolvable:$true] %s249
          %255 = dma.hbm_to_vmem [thread:$0]  %s2, 256, %s250, [#allocation6], 64, 64, 4
        $region16: #{tpu_custom_call.1} parent=11 // pred_fallthru
          _
        // Predicated region
        $region17: #{tpu_custom_call.1} parent=11 // pred_check
          %p256 = pneg %p118
        $region18: #{tpu_custom_call.1} parent=11 // pred_check_branch
          %258 = sbr.rel (%p256) target = $region20
        $region19: #{tpu_custom_call.1} parent=11 // pred_region
          _
        $region20: #{tpu_custom_call.1} parent=11 // pred_fallthru
          _
        // Predicated region
        $region21: #{tpu_custom_call.1} parent=11 // pred_check
          %p259 = pneg %p139
        $region22: #{tpu_custom_call.1} parent=11 // pred_check_branch
          %261 = sbr.rel (%p259) target = $region24
        $region23: #{tpu_custom_call.1} parent=11 // pred_region
          %s263 = ssub.s32 256, 256
          %264 = vsyncadd [#allocation9], %s263
          %s265 = sshll.u32 [#allocation8], 4
          %s266 = int_to_ptr.vmem [resolvable:$true] %s265
          %271 = dma.hbm_to_vmem [thread:$0]  %s4, 256, %s266, [#allocation9], 64, 64, 4
        $region24: #{tpu_custom_call.1} parent=11 // pred_fallthru
          _
        // Predicated region
        $region25: #{tpu_custom_call.1} parent=11 // pred_check
          %p272 = pneg %p160
        $region26: #{tpu_custom_call.1} parent=11 // pred_check_branch
          %274 = sbr.rel (%p272) target = $region28
        $region27: #{tpu_custom_call.1} parent=11 // pred_region
          _
        $region28: #{tpu_custom_call.1} parent=11 // pred_fallthru
          _
        // Predicated region
        $region29: #{tpu_custom_call.1} parent=11 // pred_check
          %p275 = pneg %p181
        $region30: #{tpu_custom_call.1} parent=11 // pred_check_branch
          %277 = sbr.rel (%p275) target = $region32
        $region31: #{tpu_custom_call.1} parent=11 // pred_region
          _
        $region32: #{tpu_custom_call.1} parent=11 // pred_fallthru
          _
        // Predicated region
        $region33: #{tpu_custom_call.1} parent=11 // pred_check
          %p278 = pneg %p202
        $region34: #{tpu_custom_call.1} parent=11 // pred_check_branch
          %280 = sbr.rel (%p278) target = $region36
        $region35: #{tpu_custom_call.1} parent=11 // pred_region
          _
        $region36: #{tpu_custom_call.1} parent=11 // pred_fallthru
          _
      $region12: #{tpu_custom_call.1} parent=5 // pred_fallthru
        _
      %p281 = scmp.lt.s32.totalorder %s24, 2
      // Predicated region
      $region37: #{tpu_custom_call.1} parent=5 // pred_check
        %p282 = pneg %p281
      $region38: #{tpu_custom_call.1} parent=5 // pred_check_branch
        %284 = sbr.rel (%p282) target = $region40
      $region39: #{tpu_custom_call.1} parent=5 // pred_region
        // Predicated region
        $region41: #{tpu_custom_call.1} parent=39 // pred_check
          %p285 = pneg %p44
        $region42: #{tpu_custom_call.1} parent=39 // pred_check_branch
          %287 = sbr.rel (%p285) target = $region44
        $region43: #{tpu_custom_call.1} parent=39 // pred_region
          %s288 = sand.u32 %s34, 1
          %s289 = scalar_lea.sflag [#allocation3], %s288
          %s290 = sand.u32 %s34, 1
          %s291 = smul.addr %s290, 8
          %s292 = scalar_lea.vmem [#allocation2], %s291
          %s294 = ssub.s32 128, 128
          %295 = vsyncadd %s289, %s294
          %s296 = smul.addr %s24, 128
          %s297 = scalar_lea.hbm %s0, %s296
          %s299 = sshll.u32 %s292, 4
          %s300 = int_to_ptr.vmem [resolvable:$true] %s299
          %302 = dma.hbm_to_vmem [thread:$0]  %s297, 128, %s300, %s289
        $region44: #{tpu_custom_call.1} parent=39 // pred_fallthru
          _
        // Predicated region
        $region45: #{tpu_custom_call.1} parent=39 // pred_check
          %p303 = pneg %p70
        $region46: #{tpu_custom_call.1} parent=39 // pred_check_branch
          %305 = sbr.rel (%p303) target = $region48
        $region47: #{tpu_custom_call.1} parent=39 // pred_region
          %s306 = sand.u32 %s24, 1
          %s307 = scalar_lea.sflag [#allocation6], %s306
          %s308 = sand.u32 %s60, 1
          %s309 = scalar_lea.vmem [#allocation5], %s308
          %s311 = ssub.s32 16, 16
          %312 = vsyncadd %s307, %s311
          %s313 = smul.addr %s24, 16
          %s314 = scalar_lea.hbm %s1, %s313
          %s316 = sshll.u32 %s309, 4
          %s317 = int_to_ptr.vmem [resolvable:$true] %s316
          %319 = dma.hbm_to_vmem [thread:$0]  %s314, 16, %s317, %s307
        $region48: #{tpu_custom_call.1} parent=39 // pred_fallthru
          _
      $region40: #{tpu_custom_call.1} parent=5 // pred_fallthru
        _
      %p320 = scmp.le.s32.totalorder 1, %s24
      %p321 = scmp.lt.s32.totalorder %s24, 3
      %p322 = pnand %p320, %p321
      %p323 = pneg %p322
      // Predicated region
      $region49: #{tpu_custom_call.1} parent=5 // pred_check
        _
      $region50: #{tpu_custom_call.1} parent=5 // pred_check_branch
        %325 = sbr.rel (%p322) target = $region52
      $region51: #{tpu_custom_call.1} parent=5 // pred_region
        %s326 = ssub.s32 %s24, 1
        %s327 = sand.u32 %s37, 1
        %s328 = scalar_lea.sflag [#allocation3], %s327
        %s329 = sand.u32 %s37, 1
        %s330 = smul.addr %s329, 8
        %s331 = scalar_lea.vmem [#allocation2], %s330
        // Predicated region
        $region53: #{tpu_custom_call.1} parent=51 // pred_check
          %p332 = pneg %p50
        $region54: #{tpu_custom_call.1} parent=51 // pred_check_branch
          %334 = sbr.rel (%p332) target = $region56
        $region55: #{tpu_custom_call.1} parent=51 // pred_region
          %335 = dma.done %s328, 128
        $region56: #{tpu_custom_call.1} parent=51 // pred_fallthru
          _
        %s336 = sand.u32 %s29, 1
        %s337 = scalar_lea.sflag [#allocation6], %s336
        %s338 = sand.u32 %s63, 1
        %s339 = scalar_lea.vmem [#allocation5], %s338
        // Predicated region
        $region57: #{tpu_custom_call.1} parent=51 // pred_check
          %p340 = pneg %p76
        $region58: #{tpu_custom_call.1} parent=51 // pred_check_branch
          %342 = sbr.rel (%p340) target = $region60
        $region59: #{tpu_custom_call.1} parent=51 // pred_region
          %343 = dma.done %s337, 16
        $region60: #{tpu_custom_call.1} parent=51 // pred_fallthru
          _
        // Predicated region
        $region61: #{tpu_custom_call.1} parent=51 // pred_check
          %p344 = pneg %p97
        $region62: #{tpu_custom_call.1} parent=51 // pred_check_branch
          %346 = sbr.rel (%p344) target = $region64
        $region63: #{tpu_custom_call.1} parent=51 // pred_region
          %347 = dma.done [#allocation6], 256
        $region64: #{tpu_custom_call.1} parent=51 // pred_fallthru
          _
        // Predicated region
        $region65: #{tpu_custom_call.1} parent=51 // pred_check
          %p348 = pneg %p139
        $region66: #{tpu_custom_call.1} parent=51 // pred_check_branch
          %350 = sbr.rel (%p348) target = $region68
        $region67: #{tpu_custom_call.1} parent=51 // pred_region
          %351 = dma.done [#allocation9], 256
        $region68: #{tpu_custom_call.1} parent=51 // pred_fallthru
          _
        %s352 = sand.u32 %s37, 1
        %s353 = scalar_lea.sflag [#allocation3], %s352
        %s354 = sand.u32 %s37, 1
        %s355 = smul.addr %s354, 8
        %s356 = scalar_lea.vmem [#allocation2], %s355
        %p357 = pneg %p50
        %p358 = pneg %p47
        %s359 = sand.u32 %s29, 1
        %s360 = scalar_lea.sflag [#allocation6], %s359
        %s361 = sand.u32 %s63, 1
        %s362 = scalar_lea.vmem [#allocation5], %s361
        %p363 = pneg %p76
        %p364 = pneg %p73
        %p365 = pneg %p97
        %p366 = pneg %p94
        %p367 = pneg %p118
        %p368 = pneg %p115
        %p369 = pneg %p139
        %p370 = pneg %p136
        %p371 = pneg %p160
        %p372 = pneg %p157
        %p373 = pneg %p181
        %p374 = pneg %p178
        %p375 = pneg %p202
        %p376 = pneg %p199
        %p377 = pneg %p228
        %p378 = pneg %p225
        %s379 = sand.u32 %s215, 1
        %s380 = scalar_lea.sflag [#allocation4], %s379
        %s381 = sand.u32 %s215, 1
        %s382 = smul.addr %s381, 8
        %s383 = scalar_lea.vmem [#allocation10], %s382
        %v385 = vld [vmem:[%s331] sm:$0xff]
        %v386 = vpack.c.bf16 %v385, %v385
        %v387 = vld [vmem:[#allocation7] sm:$0xf]
        %v388 = vld [vmem:[#allocation7 + $0x4] sm:$0xf]
        %v389 = vld [vmem:[#allocation7 + $0x8] sm:$0xf]
        %v390 = vld [vmem:[#allocation7 + $0xc] sm:$0xf]
        %v391 = vld [vmem:[%s3] sm:$0x1]
        %v393 = vlaneseq
        %v394 = vshrl.u32 %v393, 7
        %v395 = vsub.s32 0, %v394
        %v396 = vrot.slane %v391, %v395
        %v402 = vunpack.c.l.b16 %v387
        %v403 = vunpack.c.l.b16 %v388
        %v404 = vunpack.c.l.b16 %v389
        %v405 = vunpack.c.l.b16 %v390
        %v406 = vpack.c.b16 %v403, %v402
        %v407 = vpack.c.b16 %v405, %v404
        %vm410 = vcmask 261120
        %v412 = vsel %vm410, %v386, 0
        %414 = vmatprep.subr.bf16.mxu0 0
        %415 = vmatpush1.bf16.msra.mxu0 0
        %416 = vmatprep.subr.bf16.mxu0 0
        %417 = vmatpush1.bf16.msra.mxu0 0
        %418 = vmatprep.subr.bf16.mxu0 0
        %419 = vmatpush1.bf16.msra.mxu0 0
        %420 = vmatprep.subr.bf16.mxu0 0
        %421 = vmatpush1.bf16.msra.mxu0 0
        %422 = vmatprep.subr.bf16.mxu0 0
        %423 = vmatpush1.bf16.msra.mxu0 0
        %424 = vmatprep.subr.bf16.mxu0 0
        %425 = vmatpush1.bf16.msra.mxu0 0
        %426 = vmatprep.subr.bf16.mxu0 0
        %427 = vmatpush1.bf16.msra.mxu0 %v407
        %428 = vmatprep.subr.bf16.mxu0 0
        %429 = vmatpush1.bf16.msra.mxu0 %v406
        %430 = vmatprep.subr.bf16.mxu0 0
        %431 = vmatpush2.bf16.msra.mxu0 0
        %432 = vmatprep.subr.bf16.mxu0 0
        %433 = vmatpush2.bf16.msra.mxu0 0
        %434 = vmatprep.subr.bf16.mxu0 0
        %435 = vmatpush2.bf16.msra.mxu0 0
        %436 = vmatprep.subr.bf16.mxu0 0
        %437 = vmatpush2.bf16.msra.mxu0 0
        %438 = vmatprep.subr.bf16.mxu0 0
        %439 = vmatpush2.bf16.msra.mxu0 0
        %440 = vmatprep.subr.bf16.mxu0 0
        %441 = vmatpush2.bf16.msra.mxu0 0
        %442 = vmatprep.subr.bf16.mxu0 0
        %443 = vmatpush2.bf16.msra.mxu0 0
        %444 = vmatprep.subr.bf16.mxu0 0
        %445 = vmatpush2.bf16.msra.mxu0 0
        %446 = vmatprep.mubr.bf16.mxu0 0
        %447 = vmatmul.mubr.bf16.gmra.mxu0 %v412
        %v448 = vpop.f32.mrf.mxu0
        %v449 = vadd.f32 %v396, %v448
        %v450 = vpop.f32.mrf.mxu0
        %v451 = vpop.f32.mrf.mxu0
        %v452 = vpop.f32.mrf.mxu0
        %453 = vdwg.mxu0
        %v454 = vld [vmem:[%s339] sm:$0x1]
        %v456 = vlaneseq
        %v457 = vshrl.u32 %v456, 7
        %v458 = vsub.s32 0, %v457
        %v459 = vrot.slane %v454, %v458
        %v461 = vpack.c.bf16 %v449, %v449
        %463 = vrot.lane.b32.xlu0 %v461, 96
        %v464 = vpop.permute.xlu0 %463
        %vm465 = vcmask 64512
        %v467 = vsel %vm465, %v461, 0
        %v470 = vsel %vm465, %v464, 0
        %472 = vmatprep.subr.bf16.mxu0 0
        %473 = vmatpush1.bf16.xpose.msra.mxu0 0
        %474 = vmatprep.subr.bf16.mxu0 0
        %475 = vmatpush1.bf16.xpose.msra.mxu0 0
        %476 = vmatprep.subr.bf16.mxu0 0
        %477 = vmatpush1.bf16.xpose.msra.mxu0 0
        %478 = vmatprep.subr.bf16.mxu0 0
        %479 = vmatpush1.bf16.xpose.msra.mxu0 0
        %480 = vmatprep.subr.bf16.mxu0 0
        %481 = vmatpush1.bf16.xpose.msra.mxu0 0
        %482 = vmatprep.subr.bf16.mxu0 0
        %483 = vmatpush1.bf16.xpose.msra.mxu0 0
        %484 = vmatprep.subr.bf16.mxu0 0
        %485 = vmatpush1.bf16.xpose.msra.mxu0 0
        %486 = vmatprep.subr.bf16.mxu0 0
        %487 = vmatpush1.bf16.xpose.msra.mxu0 %v470
        %488 = vmatprep.subr.bf16.mxu0 0
        %489 = vmatpush2.bf16.xpose.msra.mxu0 0
        %490 = vmatprep.subr.bf16.mxu0 0
        %491 = vmatpush2.bf16.xpose.msra.mxu0 0
        %492 = vmatprep.subr.bf16.mxu0 0
        %493 = vmatpush2.bf16.xpose.msra.mxu0 0
        %494 = vmatprep.subr.bf16.mxu0 0
        %495 = vmatpush2.bf16.xpose.msra.mxu0 0
        %496 = vmatprep.subr.bf16.mxu0 0
        %497 = vmatpush2.bf16.xpose.msra.mxu0 0
        %498 = vmatprep.subr.bf16.mxu0 0
        %499 = vmatpush2.bf16.xpose.msra.mxu0 0
        %500 = vmatprep.subr.bf16.mxu0 0
        %501 = vmatpush2.bf16.xpose.msra.mxu0 0
        %502 = vmatprep.subr.bf16.mxu0 0
        %503 = vmatpush2.bf16.xpose.msra.mxu0 0
        %504 = vmatprep.mubr.bf16.mxu0 0
        %505 = vmatmul.mubr.bf16.gmra.mxu0 %v467
        %v506 = vpop.f32.mrf.mxu0
        %v507 = vadd.f32 %v459, %v506
        %v508 = vpop.f32.mrf.mxu0
        %v509 = vpop.f32.mrf.mxu0
        %v510 = vpop.f32.mrf.mxu0
        %511 = vdwg.mxu0
        %v512 = vsel %vm465, %v507, -inf
        %513 = vmax.xlane.f32.xlu0 %v512
        %v514 = vpop.xlane.xlu0 %513
        %v515 = vsub.f32 %v507, %v514
        %v516 = vmul.f32 %v515, 1.442695
        %v517 = vpow.pop %v516
        %v518 = vsel %vm465, %v517, 0.0
        %519 = vadd.xlane.f32.xlu0 %v518
        %v520 = vpop.xlane.xlu0 %519
        %v521 = vpack.c.bf16 %v517, %v517
        %522 = vrot.lane.b32.xlu0 %v461, 64
        %v523 = vpop.permute.xlu0 %522
        %v525 = vsel %vm465, %v521, 0
        %vm527 = vcmask 1043456
        %v529 = vsel %vm527, %v523, 0
        %531 = vmatprep.subr.bf16.mxu0 0
        %532 = vmatpush1.bf16.msra.mxu0 0
        %533 = vmatprep.subr.bf16.mxu0 0
        %534 = vmatpush1.bf16.msra.mxu0 0
        %535 = vmatprep.subr.bf16.mxu0 0
        %536 = vmatpush1.bf16.msra.mxu0 0
        %537 = vmatprep.subr.bf16.mxu0 0
        %538 = vmatpush1.bf16.msra.mxu0 0
        %539 = vmatprep.subr.bf16.mxu0 0
        %540 = vmatpush1.bf16.msra.mxu0 0
        %541 = vmatprep.subr.bf16.mxu0 0
        %542 = vmatpush1.bf16.msra.mxu0 0
        %543 = vmatprep.subr.bf16.mxu0 0
        %544 = vmatpush1.bf16.msra.mxu0 0
        %545 = vmatprep.subr.bf16.mxu0 0
        %546 = vmatpush1.bf16.msra.mxu0 %v529
        %547 = vmatprep.subr.bf16.mxu0 0
        %548 = vmatpush2.bf16.msra.mxu0 0
        %549 = vmatprep.subr.bf16.mxu0 0
        %550 = vmatpush2.bf16.msra.mxu0 0
        %551 = vmatprep.subr.bf16.mxu0 0
        %552 = vmatpush2.bf16.msra.mxu0 0
        %553 = vmatprep.subr.bf16.mxu0 0
        %554 = vmatpush2.bf16.msra.mxu0 0
        %555 = vmatprep.subr.bf16.mxu0 0
        %556 = vmatpush2.bf16.msra.mxu0 0
        %557 = vmatprep.subr.bf16.mxu0 0
        %558 = vmatpush2.bf16.msra.mxu0 0
        %559 = vmatprep.subr.bf16.mxu0 0
        %560 = vmatpush2.bf16.msra.mxu0 0
        %561 = vmatprep.subr.bf16.mxu0 0
        %562 = vmatpush2.bf16.msra.mxu0 0
        %563 = vmatprep.mubr.bf16.mxu0 0
        %564 = vmatmul.mubr.bf16.gmra.mxu0 %v525
        %v565 = vpop.f32.mrf.mxu0
        %v566 = vadd.f32 0.0, %v565
        %v567 = vpop.f32.mrf.mxu0
        %v568 = vpop.f32.mrf.mxu0
        %v569 = vpop.f32.mrf.mxu0
        %570 = vdwg.mxu0
        %v571 = vrcp.pop %v520
        %v572 = vmul.f32 %v566, %v571
        %573 = vrot.lane.b32.xlu0 %v461, 120
        %v574 = vpop.permute.xlu0 %573
        %575 = vrot.lane.b32.xlu0 %v461, 88
        %v576 = vpop.permute.xlu0 %575
        %v578 = vsel %vm465, %v574, 0
        %v581 = vsel %vm465, %v576, 0
        %583 = vmatprep.subr.bf16.mxu0 0
        %584 = vmatpush1.bf16.xpose.msra.mxu0 0
        %585 = vmatprep.subr.bf16.mxu0 0
        %586 = vmatpush1.bf16.xpose.msra.mxu0 0
        %587 = vmatprep.subr.bf16.mxu0 0
        %588 = vmatpush1.bf16.xpose.msra.mxu0 0
        %589 = vmatprep.subr.bf16.mxu0 0
        %590 = vmatpush1.bf16.xpose.msra.mxu0 0
        %591 = vmatprep.subr.bf16.mxu0 0
        %592 = vmatpush1.bf16.xpose.msra.mxu0 0
        %593 = vmatprep.subr.bf16.mxu0 0
        %594 = vmatpush1.bf16.xpose.msra.mxu0 0
        %595 = vmatprep.subr.bf16.mxu0 0
        %596 = vmatpush1.bf16.xpose.msra.mxu0 0
        %597 = vmatprep.subr.bf16.mxu0 0
        %598 = vmatpush1.bf16.xpose.msra.mxu0 %v581
        %599 = vmatprep.subr.bf16.mxu0 0
        %600 = vmatpush2.bf16.xpose.msra.mxu0 0
        %601 = vmatprep.subr.bf16.mxu0 0
        %602 = vmatpush2.bf16.xpose.msra.mxu0 0
        %603 = vmatprep.subr.bf16.mxu0 0
        %604 = vmatpush2.bf16.xpose.msra.mxu0 0
        %605 = vmatprep.subr.bf16.mxu0 0
        %606 = vmatpush2.bf16.xpose.msra.mxu0 0
        %607 = vmatprep.subr.bf16.mxu0 0
        %608 = vmatpush2.bf16.xpose.msra.mxu0 0
        %609 = vmatprep.subr.bf16.mxu0 0
        %610 = vmatpush2.bf16.xpose.msra.mxu0 0
        %611 = vmatprep.subr.bf16.mxu0 0
        %612 = vmatpush2.bf16.xpose.msra.mxu0 0
        %613 = vmatprep.subr.bf16.mxu0 0
        %614 = vmatpush2.bf16.xpose.msra.mxu0 0
        %615 = vmatprep.mubr.bf16.mxu0 0
        %616 = vmatmul.mubr.bf16.gmra.mxu0 %v578
        %v617 = vpop.f32.mrf.mxu0
        %v618 = vadd.f32 %v459, %v617
        %v619 = vpop.f32.mrf.mxu0
        %v620 = vpop.f32.mrf.mxu0
        %v621 = vpop.f32.mrf.mxu0
        %622 = vdwg.mxu0
        %v623 = vsel %vm465, %v618, -inf
        %624 = vmax.xlane.f32.xlu0 %v623
        %v625 = vpop.xlane.xlu0 %624
        %v626 = vsub.f32 %v618, %v625
        %v627 = vmul.f32 %v626, 1.442695
        %v628 = vpow.pop %v627
        %v629 = vsel %vm465, %v628, 0.0
        %630 = vadd.xlane.f32.xlu0 %v629
        %v631 = vpop.xlane.xlu0 %630
        %v632 = vpack.c.bf16 %v628, %v628
        %633 = vrot.lane.b32.xlu0 %v461, 56
        %v634 = vpop.permute.xlu0 %633
        %v636 = vsel %vm465, %v632, 0
        %v639 = vsel %vm527, %v634, 0
        %641 = vmatprep.subr.bf16.mxu0 0
        %642 = vmatpush1.bf16.msra.mxu0 0
        %643 = vmatprep.subr.bf16.mxu0 0
        %644 = vmatpush1.bf16.msra.mxu0 0
        %645 = vmatprep.subr.bf16.mxu0 0
        %646 = vmatpush1.bf16.msra.mxu0 0
        %647 = vmatprep.subr.bf16.mxu0 0
        %648 = vmatpush1.bf16.msra.mxu0 0
        %649 = vmatprep.subr.bf16.mxu0 0
        %650 = vmatpush1.bf16.msra.mxu0 0
        %651 = vmatprep.subr.bf16.mxu0 0
        %652 = vmatpush1.bf16.msra.mxu0 0
        %653 = vmatprep.subr.bf16.mxu0 0
        %654 = vmatpush1.bf16.msra.mxu0 0
        %655 = vmatprep.subr.bf16.mxu0 0
        %656 = vmatpush1.bf16.msra.mxu0 %v639
        %657 = vmatprep.subr.bf16.mxu0 0
        %658 = vmatpush2.bf16.msra.mxu0 0
        %659 = vmatprep.subr.bf16.mxu0 0
        %660 = vmatpush2.bf16.msra.mxu0 0
        %661 = vmatprep.subr.bf16.mxu0 0
        %662 = vmatpush2.bf16.msra.mxu0 0
        %663 = vmatprep.subr.bf16.mxu0 0
        %664 = vmatpush2.bf16.msra.mxu0 0
        %665 = vmatprep.subr.bf16.mxu0 0
        %666 = vmatpush2.bf16.msra.mxu0 0
        %667 = vmatprep.subr.bf16.mxu0 0
        %668 = vmatpush2.bf16.msra.mxu0 0
        %669 = vmatprep.subr.bf16.mxu0 0
        %670 = vmatpush2.bf16.msra.mxu0 0
        %671 = vmatprep.subr.bf16.mxu0 0
        %672 = vmatpush2.bf16.msra.mxu0 0
        %673 = vmatprep.mubr.bf16.mxu0 0
        %674 = vmatmul.mubr.bf16.gmra.mxu0 %v636
        %v675 = vpop.f32.mrf.mxu0
        %v676 = vadd.f32 0.0, %v675
        %v677 = vpop.f32.mrf.mxu0
        %v678 = vpop.f32.mrf.mxu0
        %v679 = vpop.f32.mrf.mxu0
        %680 = vdwg.mxu0
        %v681 = vrcp.pop %v631
        %v682 = vmul.f32 %v676, %v681
        %683 = vrot.lane.b32.xlu0 %v461, 112
        %v684 = vpop.permute.xlu0 %683
        %685 = vrot.lane.b32.xlu0 %v461, 80
        %v686 = vpop.permute.xlu0 %685
        %v688 = vsel %vm465, %v684, 0
        %v691 = vsel %vm465, %v686, 0
        %693 = vmatprep.subr.bf16.mxu0 0
        %694 = vmatpush1.bf16.xpose.msra.mxu0 0
        %695 = vmatprep.subr.bf16.mxu0 0
        %696 = vmatpush1.bf16.xpose.msra.mxu0 0
        %697 = vmatprep.subr.bf16.mxu0 0
        %698 = vmatpush1.bf16.xpose.msra.mxu0 0
        %699 = vmatprep.subr.bf16.mxu0 0
        %700 = vmatpush1.bf16.xpose.msra.mxu0 0
        %701 = vmatprep.subr.bf16.mxu0 0
        %702 = vmatpush1.bf16.xpose.msra.mxu0 0
        %703 = vmatprep.subr.bf16.mxu0 0
        %704 = vmatpush1.bf16.xpose.msra.mxu0 0
        %705 = vmatprep.subr.bf16.mxu0 0
        %706 = vmatpush1.bf16.xpose.msra.mxu0 0
        %707 = vmatprep.subr.bf16.mxu0 0
        %708 = vmatpush1.bf16.xpose.msra.mxu0 %v691
        %709 = vmatprep.subr.bf16.mxu0 0
        %710 = vmatpush2.bf16.xpose.msra.mxu0 0
        %711 = vmatprep.subr.bf16.mxu0 0
        %712 = vmatpush2.bf16.xpose.msra.mxu0 0
        %713 = vmatprep.subr.bf16.mxu0 0
        %714 = vmatpush2.bf16.xpose.msra.mxu0 0
        %715 = vmatprep.subr.bf16.mxu0 0
        %716 = vmatpush2.bf16.xpose.msra.mxu0 0
        %717 = vmatprep.subr.bf16.mxu0 0
        %718 = vmatpush2.bf16.xpose.msra.mxu0 0
        %719 = vmatprep.subr.bf16.mxu0 0
        %720 = vmatpush2.bf16.xpose.msra.mxu0 0
        %721 = vmatprep.subr.bf16.mxu0 0
        %722 = vmatpush2.bf16.xpose.msra.mxu0 0
        %723 = vmatprep.subr.bf16.mxu0 0
        %724 = vmatpush2.bf16.xpose.msra.mxu0 0
        %725 = vmatprep.mubr.bf16.mxu0 0
        %726 = vmatmul.mubr.bf16.gmra.mxu0 %v688
        %v727 = vpop.f32.mrf.mxu0
        %v728 = vadd.f32 %v459, %v727
        %v729 = vpop.f32.mrf.mxu0
        %v730 = vpop.f32.mrf.mxu0
        %v731 = vpop.f32.mrf.mxu0
        %732 = vdwg.mxu0
        %v733 = vsel %vm465, %v728, -inf
        %734 = vmax.xlane.f32.xlu0 %v733
        %v735 = vpop.xlane.xlu0 %734
        %v736 = vsub.f32 %v728, %v735
        %v737 = vmul.f32 %v736, 1.442695
        %v738 = vpow.pop %v737
        %v739 = vsel %vm465, %v738, 0.0
        %740 = vadd.xlane.f32.xlu0 %v739
        %v741 = vpop.xlane.xlu0 %740
        %v742 = vpack.c.bf16 %v738, %v738
        %743 = vrot.lane.b32.xlu0 %v461, 48
        %v744 = vpop.permute.xlu0 %743
        %v746 = vsel %vm465, %v742, 0
        %v749 = vsel %vm527, %v744, 0
        %751 = vmatprep.subr.bf16.mxu0 0
        %752 = vmatpush1.bf16.msra.mxu0 0
        %753 = vmatprep.subr.bf16.mxu0 0
        %754 = vmatpush1.bf16.msra.mxu0 0
        %755 = vmatprep.subr.bf16.mxu0 0
        %756 = vmatpush1.bf16.msra.mxu0 0
        %757 = vmatprep.subr.bf16.mxu0 0
        %758 = vmatpush1.bf16.msra.mxu0 0
        %759 = vmatprep.subr.bf16.mxu0 0
        %760 = vmatpush1.bf16.msra.mxu0 0
        %761 = vmatprep.subr.bf16.mxu0 0
        %762 = vmatpush1.bf16.msra.mxu0 0
        %763 = vmatprep.subr.bf16.mxu0 0
        %764 = vmatpush1.bf16.msra.mxu0 0
        %765 = vmatprep.subr.bf16.mxu0 0
        %766 = vmatpush1.bf16.msra.mxu0 %v749
        %767 = vmatprep.subr.bf16.mxu0 0
        %768 = vmatpush2.bf16.msra.mxu0 0
        %769 = vmatprep.subr.bf16.mxu0 0
        %770 = vmatpush2.bf16.msra.mxu0 0
        %771 = vmatprep.subr.bf16.mxu0 0
        %772 = vmatpush2.bf16.msra.mxu0 0
        %773 = vmatprep.subr.bf16.mxu0 0
        %774 = vmatpush2.bf16.msra.mxu0 0
        %775 = vmatprep.subr.bf16.mxu0 0
        %776 = vmatpush2.bf16.msra.mxu0 0
        %777 = vmatprep.subr.bf16.mxu0 0
        %778 = vmatpush2.bf16.msra.mxu0 0
        %779 = vmatprep.subr.bf16.mxu0 0
        %780 = vmatpush2.bf16.msra.mxu0 0
        %781 = vmatprep.subr.bf16.mxu0 0
        %782 = vmatpush2.bf16.msra.mxu0 0
        %783 = vmatprep.mubr.bf16.mxu0 0
        %784 = vmatmul.mubr.bf16.gmra.mxu0 %v746
        %v785 = vpop.f32.mrf.mxu0
        %v786 = vadd.f32 0.0, %v785
        %v787 = vpop.f32.mrf.mxu0
        %v788 = vpop.f32.mrf.mxu0
        %v789 = vpop.f32.mrf.mxu0
        %790 = vdwg.mxu0
        %v791 = vrcp.pop %v741
        %v792 = vmul.f32 %v786, %v791
        %793 = vrot.lane.b32.xlu0 %v461, 104
        %v794 = vpop.permute.xlu0 %793
        %795 = vrot.lane.b32.xlu0 %v461, 72
        %v796 = vpop.permute.xlu0 %795
        %v798 = vsel %vm465, %v794, 0
        %v801 = vsel %vm465, %v796, 0
        %803 = vmatprep.subr.bf16.mxu0 0
        %804 = vmatpush1.bf16.xpose.msra.mxu0 0
        %805 = vmatprep.subr.bf16.mxu0 0
        %806 = vmatpush1.bf16.xpose.msra.mxu0 0
        %807 = vmatprep.subr.bf16.mxu0 0
        %808 = vmatpush1.bf16.xpose.msra.mxu0 0
        %809 = vmatprep.subr.bf16.mxu0 0
        %810 = vmatpush1.bf16.xpose.msra.mxu0 0
        %811 = vmatprep.subr.bf16.mxu0 0
        %812 = vmatpush1.bf16.xpose.msra.mxu0 0
        %813 = vmatprep.subr.bf16.mxu0 0
        %814 = vmatpush1.bf16.xpose.msra.mxu0 0
        %815 = vmatprep.subr.bf16.mxu0 0
        %816 = vmatpush1.bf16.xpose.msra.mxu0 0
        %817 = vmatprep.subr.bf16.mxu0 0
        %818 = vmatpush1.bf16.xpose.msra.mxu0 %v801
        %819 = vmatprep.subr.bf16.mxu0 0
        %820 = vmatpush2.bf16.xpose.msra.mxu0 0
        %821 = vmatprep.subr.bf16.mxu0 0
        %822 = vmatpush2.bf16.xpose.msra.mxu0 0
        %823 = vmatprep.subr.bf16.mxu0 0
        %824 = vmatpush2.bf16.xpose.msra.mxu0 0
        %825 = vmatprep.subr.bf16.mxu0 0
        %826 = vmatpush2.bf16.xpose.msra.mxu0 0
        %827 = vmatprep.subr.bf16.mxu0 0
        %828 = vmatpush2.bf16.xpose.msra.mxu0 0
        %829 = vmatprep.subr.bf16.mxu0 0
        %830 = vmatpush2.bf16.xpose.msra.mxu0 0
        %831 = vmatprep.subr.bf16.mxu0 0
        %832 = vmatpush2.bf16.xpose.msra.mxu0 0
        %833 = vmatprep.subr.bf16.mxu0 0
        %834 = vmatpush2.bf16.xpose.msra.mxu0 0
        %835 = vmatprep.mubr.bf16.mxu0 0
        %836 = vmatmul.mubr.bf16.gmra.mxu0 %v798
        %v837 = vpop.f32.mrf.mxu0
        %v838 = vadd.f32 %v459, %v837
        %v839 = vpop.f32.mrf.mxu0
        %v840 = vpop.f32.mrf.mxu0
        %v841 = vpop.f32.mrf.mxu0
        %842 = vdwg.mxu0
        %v843 = vsel %vm465, %v838, -inf
        %844 = vmax.xlane.f32.xlu0 %v843
        %v845 = vpop.xlane.xlu0 %844
        %v846 = vsub.f32 %v838, %v845
        %v847 = vmul.f32 %v846, 1.442695
        %v848 = vpow.pop %v847
        %v849 = vsel %vm465, %v848, 0.0
        %850 = vadd.xlane.f32.xlu0 %v849
        %v851 = vpop.xlane.xlu0 %850
        %v852 = vpack.c.bf16 %v848, %v848
        %853 = vrot.lane.b32.xlu0 %v461, 40
        %v854 = vpop.permute.xlu0 %853
        %v856 = vsel %vm465, %v852, 0
        %v859 = vsel %vm527, %v854, 0
        %861 = vmatprep.subr.bf16.mxu0 0
        %862 = vmatpush1.bf16.msra.mxu0 0
        %863 = vmatprep.subr.bf16.mxu0 0
        %864 = vmatpush1.bf16.msra.mxu0 0
        %865 = vmatprep.subr.bf16.mxu0 0
        %866 = vmatpush1.bf16.msra.mxu0 0
        %867 = vmatprep.subr.bf16.mxu0 0
        %868 = vmatpush1.bf16.msra.mxu0 0
        %869 = vmatprep.subr.bf16.mxu0 0
        %870 = vmatpush1.bf16.msra.mxu0 0
        %871 = vmatprep.subr.bf16.mxu0 0
        %872 = vmatpush1.bf16.msra.mxu0 0
        %873 = vmatprep.subr.bf16.mxu0 0
        %874 = vmatpush1.bf16.msra.mxu0 0
        %875 = vmatprep.subr.bf16.mxu0 0
        %876 = vmatpush1.bf16.msra.mxu0 %v859
        %877 = vmatprep.subr.bf16.mxu0 0
        %878 = vmatpush2.bf16.msra.mxu0 0
        %879 = vmatprep.subr.bf16.mxu0 0
        %880 = vmatpush2.bf16.msra.mxu0 0
        %881 = vmatprep.subr.bf16.mxu0 0
        %882 = vmatpush2.bf16.msra.mxu0 0
        %883 = vmatprep.subr.bf16.mxu0 0
        %884 = vmatpush2.bf16.msra.mxu0 0
        %885 = vmatprep.subr.bf16.mxu0 0
        %886 = vmatpush2.bf16.msra.mxu0 0
        %887 = vmatprep.subr.bf16.mxu0 0
        %888 = vmatpush2.bf16.msra.mxu0 0
        %889 = vmatprep.subr.bf16.mxu0 0
        %890 = vmatpush2.bf16.msra.mxu0 0
        %891 = vmatprep.subr.bf16.mxu0 0
        %892 = vmatpush2.bf16.msra.mxu0 0
        %893 = vmatprep.mubr.bf16.mxu0 0
        %894 = vmatmul.mubr.bf16.gmra.mxu0 %v856
        %v895 = vpop.f32.mrf.mxu0
        %v896 = vadd.f32 0.0, %v895
        %v897 = vpop.f32.mrf.mxu0
        %v898 = vpop.f32.mrf.mxu0
        %v899 = vpop.f32.mrf.mxu0
        %900 = vdwg.mxu0
        %v901 = vrcp.pop %v851
        %v902 = vmul.f32 %v896, %v901
        %904 = vrot.lane.b32.xlu0 %v682, 8
        %v905 = vpop.permute.xlu0 %904
        %908 = vrot.lane.b32.xlu0 %v792, 16
        %v909 = vpop.permute.xlu0 %908
        %912 = vrot.lane.b32.xlu0 %v902, 24
        %v913 = vpop.permute.xlu0 %912
        %v915 = vsel %vm465, %v572, %v905
        %vm916 = vcmask 130048
        %v917 = vsel %vm916, %v915, %v909
        %vm918 = vcmask 195584
        %v919 = vsel %vm918, %v917, %v913
        %v920 = vpack.c.bf16 %v919, %v919
        %v921 = vld [vmem:[#allocation8] sm:$0xf]
        %v922 = vld [vmem:[#allocation8 + $0x4] sm:$0xf]
        %v923 = vld [vmem:[#allocation8 + $0x8] sm:$0xf]
        %v924 = vld [vmem:[#allocation8 + $0xc] sm:$0xf]
        %v925 = vld [vmem:[%s5] sm:$0x1]
        %v927 = vlaneseq
        %v928 = vshrl.u32 %v927, 7
        %v929 = vsub.s32 0, %v928
        %v930 = vrot.slane %v925, %v929
        %v936 = vunpack.c.l.b16 %v921
        %v937 = vunpack.c.l.b16 %v922
        %v938 = vunpack.c.l.b16 %v923
        %v939 = vunpack.c.l.b16 %v924
        %v940 = vpack.c.b16 %v937, %v936
        %v941 = vpack.c.b16 %v939, %v938
        %v945 = vsel %vm410, %v920, 0
        %947 = vmatprep.subr.bf16.mxu0 0
        %948 = vmatpush1.bf16.msra.mxu0 0
        %949 = vmatprep.subr.bf16.mxu0 0
        %950 = vmatpush1.bf16.msra.mxu0 0
        %951 = vmatprep.subr.bf16.mxu0 0
        %952 = vmatpush1.bf16.msra.mxu0 0
        %953 = vmatprep.subr.bf16.mxu0 0
        %954 = vmatpush1.bf16.msra.mxu0 0
        %955 = vmatprep.subr.bf16.mxu0 0
        %956 = vmatpush1.bf16.msra.mxu0 0
        %957 = vmatprep.subr.bf16.mxu0 0
        %958 = vmatpush1.bf16.msra.mxu0 0
        %959 = vmatprep.subr.bf16.mxu0 0
        %960 = vmatpush1.bf16.msra.mxu0 %v941
        %961 = vmatprep.subr.bf16.mxu0 0
        %962 = vmatpush1.bf16.msra.mxu0 %v940
        %963 = vmatprep.subr.bf16.mxu0 0
        %964 = vmatpush2.bf16.msra.mxu0 0
        %965 = vmatprep.subr.bf16.mxu0 0
        %966 = vmatpush2.bf16.msra.mxu0 0
        %967 = vmatprep.subr.bf16.mxu0 0
        %968 = vmatpush2.bf16.msra.mxu0 0
        %969 = vmatprep.subr.bf16.mxu0 0
        %970 = vmatpush2.bf16.msra.mxu0 0
        %971 = vmatprep.subr.bf16.mxu0 0
        %972 = vmatpush2.bf16.msra.mxu0 0
        %973 = vmatprep.subr.bf16.mxu0 0
        %974 = vmatpush2.bf16.msra.mxu0 0
        %975 = vmatprep.subr.bf16.mxu0 0
        %976 = vmatpush2.bf16.msra.mxu0 0
        %977 = vmatprep.subr.bf16.mxu0 0
        %978 = vmatpush2.bf16.msra.mxu0 0
        %979 = vmatprep.mubr.bf16.mxu0 0
        %980 = vmatmul.mubr.bf16.gmra.mxu0 %v945
        %v981 = vpop.f32.mrf.mxu0
        %v982 = vadd.f32 %v930, %v981
        %v983 = vpop.f32.mrf.mxu0
        %v984 = vpop.f32.mrf.mxu0
        %v985 = vpop.f32.mrf.mxu0
        %986 = vdwg.mxu0
        %v987 = vadd.f32 %v982, %v385
        %v988 = vsel %vm410, %v987, 0.0
        %989 = vadd.xlane.f32.xlu0 %v988
        %v990 = vpop.xlane.xlu0 %989
        %v991 = vrcp.pop 32.0
        %v992 = vmul.f32 %v990, %v991
        %v993 = vsub.f32 %v987, %v992
        %v994 = vmul.f32 %v993, %v993
        %v995 = vsel %vm410, %v994, 0.0
        %996 = vadd.xlane.f32.xlu0 %v995
        %v997 = vpop.xlane.xlu0 %996
        %v998 = vmul.f32 %v997, %v991
        %v999 = vadd.f32 %v998, 1e-12
        %v1000 = vrsqrt.pop %v999
        %v1001 = vmul.f32 %v993, %v1000
        %v1002 = vld [vmem:[%s6] sm:$0x1]
        %v1004 = vlaneseq
        %v1005 = vshrl.u32 %v1004, 7
        %v1006 = vsub.s32 0, %v1005
        %v1007 = vrot.slane %v1002, %v1006
        %v1009 = vmul.f32 %v1001, %v1007
        %v1010 = vld [vmem:[%s7] sm:$0x1]
        %v1012 = vlaneseq
        %v1013 = vshrl.u32 %v1012, 7
        %v1014 = vsub.s32 0, %v1013
        %v1015 = vrot.slane %v1010, %v1014
        %v1017 = vadd.f32 %v1009, %v1015
        %1018 = vst.msk [vmem:[%s383] sm:$0xff] %vm410, %v1017
        %s1019 = sand.u32 %s215, 1
        %s1020 = scalar_lea.sflag [#allocation4], %s1019
        %s1021 = sand.u32 %s215, 1
        %s1022 = smul.addr %s1021, 8
        %s1023 = scalar_lea.vmem [#allocation10], %s1022
        // Predicated region
        $region69: #{tpu_custom_call.1} parent=51 // pred_check
          %p1024 = pneg %p225
        $region70: #{tpu_custom_call.1} parent=51 // pred_check_branch
          %1026 = sbr.rel (%p1024) target = $region72
        $region71: #{tpu_custom_call.1} parent=51 // pred_region
          %s1028 = ssub.s32 128, 128
          %1029 = vsyncadd %s1020, %s1028
          %s1030 = smul.addr %s29, 128
          %s1031 = scalar_lea.hbm %s8, %s1030
          %s1033 = sshll.u32 %s1023, 4
          %s1034 = int_to_ptr.vmem [resolvable:$true] %s1033
          %1036 = dma.vmem_to_hbm [thread:$0]  %s1034, 128, %s1031, %s1020
        $region72: #{tpu_custom_call.1} parent=51 // pred_fallthru
          _
      $region52: #{tpu_custom_call.1} parent=5 // pred_fallthru
        _
      %p1037 = scmp.le.s32.totalorder 2, %s24
      // Predicated region
      $region73: #{tpu_custom_call.1} parent=5 // pred_check
        %p1038 = pneg %p1037
      $region74: #{tpu_custom_call.1} parent=5 // pred_check_branch
        %1040 = sbr.rel (%p1038) target = $region76
      $region75: #{tpu_custom_call.1} parent=5 // pred_region
        %s1041 = ssub.s32 %s24, 2
        // Predicated region
        $region77: #{tpu_custom_call.1} parent=75 // pred_check
          %p1042 = pneg %p231
        $region78: #{tpu_custom_call.1} parent=75 // pred_check_branch
          %1044 = sbr.rel (%p1042) target = $region80
        $region79: #{tpu_custom_call.1} parent=75 // pred_region
          %s1045 = sand.u32 %s216, 1
          %s1046 = scalar_lea.sflag [#allocation4], %s1045
          %s1047 = sand.u32 %s216, 1
          %s1048 = smul.addr %s1047, 8
          %s1049 = scalar_lea.vmem [#allocation10], %s1048
          %1050 = dma.done %s1046, 128
        $region80: #{tpu_custom_call.1} parent=75 // pred_fallthru
          _
      $region76: #{tpu_custom_call.1} parent=5 // pred_fallthru
        _
    $region6: #{tpu_custom_call.1} parent=1 // loop_footer
      %s28 = sadd.s32 1, %s24
    $region7: #{tpu_custom_call.1} parent=1 // loop_footer_branch
      %23 = sbr.rel target = $region3
    $region8: #{tpu_custom_call.1} parent=1 // loop_exit
      _
    %1051 = vsyncpa [#allocation3], 1
    %s1052 = scalar_lea.sflag [#allocation3], 1
    %1053 = vsyncpa %s1052, 1
    %1054 = vsyncpa [#allocation6], 1
    %s1055 = scalar_lea.sflag [#allocation6], 1
    %1056 = vsyncpa %s1055, 1
    %1057 = vsyncpa [#allocation9], 1
    %1058 = vsyncpa [#allocation4], 1
    %s1059 = scalar_lea.sflag [#allocation4], 1
    %1060 = vsyncpa %s1059, 1

</llo_original>
